<compile_context>
chip_gen: v7x
topology: tpu7x:2x2x1
jax: 0.10.0
libtpu: 0.0.40
codegen_flags: <defaults>
</compile_context>

<pallas_src>
import functools

import jax
import jax.numpy as jnp
from jax.experimental import pallas as pl
from jax.experimental.pallas import tpu as pltpu


_VMEM_BUDGET = 48 * 1024 * 1024   # total double-buffered block footprint target
_VMEM_LIMIT = 56 * 1024 * 1024    # scoped-VMEM limit: > v5e 16 MiB default, < v7x 64 MiB physical


def _round_up(x, m):
    return ((x + m - 1) // m) * m


def _initializer_kernel(x_ref, w_ref, *, inv_m, scale, eps_sum):
    # x_ref: (TILE_N, M, D) candidate embeddings; w_ref: (TILE_N, D) prototypes.
    x = x_ref[...].astype(jnp.float32)                # f32 math everywhere (v5e-safe)
    s = jnp.sum(x, axis=1)                            # (TILE_N, D) sublane (XLU) reduce
    if scale is None:
        # k_shot not in {1, 5}: plain mean, no normalization.
        w_ref[...] = (s * inv_m).astype(w_ref.dtype)
    else:
        # scale * F.normalize(mean, dim=-1).  The 1/M factor cancels under L2
        # normalization; clamping ||sum|| at M*eps is exactly the eps clamp on
        # ||mean||.  rsqrt runs on the EUP; one (TILE_N, 1) coefficient, one
        # (TILE_N, D) multiply.
        sq = jnp.sum(s * s, axis=-1, keepdims=True)   # (TILE_N, 1)
        coef = scale * jax.lax.rsqrt(jnp.maximum(sq, eps_sum * eps_sum))
        w_ref[...] = (s * coef).astype(w_ref.dtype)


def _max_tile_rows(m, d, in_itemsize):
    # Input and f32 output blocks are both double-buffered by the BlockSpec pipeline.
    bytes_per_row = 2 * (m * d * in_itemsize + d * 4)
    t = _VMEM_BUDGET // bytes_per_row
    return max(8, min(512, (t // 8) * 8))


def initializer_forward(inputs, k_shot, tile_n=None):
    """inputs: (N, M, D) array (f32 or bf16) of stacked candidate embeddings per class.

    Returns (N, D) float32 prototypes matching Initializer.forward.
    """
    n, m, d = inputs.shape
    if k_shot == 1:
        scale = 1.0
    elif k_shot == 5:
        scale = 0.5
    else:
        scale = None

    in_itemsize = jnp.dtype(inputs.dtype).itemsize
    cap = _max_tile_rows(m, d, in_itemsize)           # M-aware, VMEM-budgeted
    if tile_n is None:
        tile_n = cap
        if n >= 16:
            # >= 2 parallel grid steps so v7x megacore engages both TCs.
            tile_n = min(tile_n, max(8, _round_up(n, 16) // 2))
    else:
        # User-provided tiles are still clamped to the VMEM budget and sublane-aligned.
        tile_n = min(max(8, _round_up(tile_n, 8)), cap)

    if n <= tile_n:
        # Single block: exact fit (legal for any n since the block dim equals the
        # full array dim) -> no masked boundary stores at all.
        tile_n = n
    grid_n = pl.cdiv(n, tile_n)

    kernel = functools.partial(
        _initializer_kernel, inv_m=1.0 / m, scale=scale, eps_sum=1e-12 * m
    )

    # No jnp.pad / out-slice: ragged last block handled by Pallas boundary masking.
    return pl.pallas_call(
        kernel,
        out_shape=jax.ShapeDtypeStruct((n, d), jnp.float32),
        grid=(grid_n,),
        in_specs=[pl.BlockSpec((tile_n, m, d), lambda i: (i, 0, 0))],
        out_specs=pl.BlockSpec((tile_n, d), lambda i: (i, 0)),
        compiler_params=pltpu.CompilerParams(
            dimension_semantics=("parallel",),
            vmem_limit_bytes=_VMEM_LIMIT,
        ),
    )(inputs)


def _reference(inputs, k_shot):
    w = jnp.mean(inputs.astype(jnp.float32), axis=1)
    if k_shot in (1, 5):
        denom = jnp.maximum(jnp.linalg.norm(w, axis=-1, keepdims=True), 1e-12)
        w = w / denom
        if k_shot == 5:
            w = 0.5 * w
    return w


if __name__ == "__main__":
    # Synthetic "candidate word embeddings": N classes, M candidates each,
    # embedding_dim = 768 (fixed by the module's __init__).
    N_WAY = 5
    M_CAND = 8
    EMB_DIM = 768

    key = jax.random.PRNGKey(0)
    inputs = jax.random.normal(key, (N_WAY, M_CAND, EMB_DIM), dtype=jnp.float32)

    # k_shot == 1 branch (L2 normalize)
    w1 = jax.block_until_ready(initializer_forward(inputs, 1))
    assert w1.shape == (N_WAY, EMB_DIM)
    assert jnp.allclose(w1, _reference(inputs, 1), atol=1e-5, rtol=1e-5)

    # k_shot == 5 branch (0.5 * normalize)
    w5 = jax.block_until_ready(initializer_forward(inputs, 5))
    assert jnp.allclose(w5, _reference(inputs, 5), atol=1e-5, rtol=1e-5)

    # fall-through branch (no normalization): verifies the mean scaling path
    w3 = jax.block_until_ready(initializer_forward(inputs, 3))
    assert jnp.allclose(w3, _reference(inputs, 3), atol=1e-5, rtol=1e-5)

    # larger N: auto tiling gives >= 2 parallel grid steps and a ragged
    # (masked) boundary block, with no wrapper-side padding.
    key2 = jax.random.PRNGKey(1)
    inputs_big = jax.random.normal(key2, (40, M_CAND, EMB_DIM), dtype=jnp.float32)
    wb = jax.block_until_ready(initializer_forward(inputs_big, 1))
    assert wb.shape == (40, EMB_DIM)
    assert jnp.allclose(wb, _reference(inputs_big, 1), atol=1e-5, rtol=1e-5)

    # bf16 HBM-side inputs (halves dominant read traffic); math stays f32 in-kernel.
    inputs_bf16 = inputs.astype(jnp.bfloat16)
    wbf = jax.block_until_ready(initializer_forward(inputs_bf16, 5))
    assert jnp.allclose(wbf, _reference(inputs_bf16, 5), atol=1e-5, rtol=1e-5)

    print("KERNEL_OK")
</pallas_src>

<mosaic_0001>
module attributes {stable_mosaic.version = 11 : i64} {
  func.func @_initializer_kernel(%arg0: i32, %arg1: memref<5x8x768xf32, #tpu.memory_space<vmem>>, %arg2: memref<5x768xf32, #tpu.memory_space<vmem>>) attributes {dimension_semantics = [#tpu.dimension_semantics<parallel>], iteration_bounds = array<i64: 1>, scalar_prefetch = 0 : i64, scratch_operands = 0 : i64, tpu.core_type = #tpu.core_type<tc>, window_params = [{transform_indices = @transform_0, window_bounds = array<i64: 5, 8, 768>}, {transform_indices = @transform_1, window_bounds = array<i64: 5, 768>}]} {
    %c0 = arith.constant 0 : index
    %c0_0 = arith.constant 0 : index
    %c0_1 = arith.constant 0 : index
    %0 = vector.load %arg1[%c0, %c0_0, %c0_1] : memref<5x8x768xf32, #tpu.memory_space<vmem>>, vector<5x8x768xf32>
    %cst = arith.constant dense<0.000000e+00> : vector<5x768xf32>
    %1 = vector.multi_reduction <add>, %0, %cst [1] : vector<5x8x768xf32> to vector<5x768xf32>
    %2 = arith.mulf %1, %1 : vector<5x768xf32>
    %cst_2 = arith.constant dense<0.000000e+00> : vector<5xf32>
    %3 = vector.multi_reduction <add>, %2, %cst_2 [1] : vector<5x768xf32> to vector<5xf32>
    %4 = vector.shape_cast %3 : vector<5xf32> to vector<5x1xf32>
    %cst_3 = arith.constant 6.400000e-23 : f32
    %5 = vector.broadcast %cst_3 : f32 to vector<5x1xf32>
    %6 = arith.maximumf %4, %5 : vector<5x1xf32>
    %7 = math.rsqrt %6 : vector<5x1xf32>
    %cst_4 = arith.constant 1.000000e+00 : f32
    %8 = vector.broadcast %cst_4 : f32 to vector<5x1xf32>
    %9 = arith.mulf %8, %7 : vector<5x1xf32>
    %10 = vector.broadcast %9 : vector<5x1xf32> to vector<5x768xf32>
    %11 = arith.mulf %1, %10 : vector<5x768xf32>
    %c0_5 = arith.constant 0 : index
    %c0_6 = arith.constant 0 : index
    %12 = vector.load %arg2[%c0_5, %c0_6] : memref<5x768xf32, #tpu.memory_space<vmem>>, vector<5x768xf32>
    tpu.vector_store %arg2[%c0_5, %c0_6], %11 {strides = array<i32>} : memref<5x768xf32, #tpu.memory_space<vmem>>, vector<5x768xf32>,
    return
  }
  func.func @transform_0(%arg0: i32) -> (i32, i32, i32) {
    %c0_i32 = arith.constant 0 : i32
    %c0_i32_0 = arith.constant 0 : i32
    %c0_i32_1 = arith.constant 0 : i32
    return %arg0, %c0_i32, %c0_i32_0 : i32, i32, i32
  }
  func.func @transform_1(%arg0: i32) -> (i32, i32) {
    %c0_i32 = arith.constant 0 : i32
    %c0_i32_0 = arith.constant 0 : i32
    return %arg0, %c0_i32 : i32, i32
  }
}

</mosaic_0001>

<llo_original>
// kernel: tpu_custom_call.1
$region0: #{tpu_custom_call.1}
  #allocation0 [shape = 'u32[]', space=smem, size = 0x4, offset = 0x4, fixed_abs, tag = 'smem constant byte address 0x4 - core index']
  #allocation1 [shape = 'u32[144,128]{1,0:T(1,128)}', space=vmem, size = 0x12000, scoped, tag = 'internal scratch']
  %s0 = inlined_call_operand.hbm [shape: f32[5,8,768], index: 0, kind: input, shape index: {}]
  %s1 = inlined_call_operand.hbm [shape: f32[5,768], index: 1, kind: output, shape index: {}]
  %s2 = sld [smem:[#allocation0]]
  $region18: #{tpu_custom_call.1} parent=0
    _
  %s4 = ssub.s32 1, %s2
  %s5 = scalar_select 0, %s4, %s2
  $region1: #{tpu_custom_call.1} parent=0
    #allocation2 [shape = 'u8[122880]{0}', space=vmem, size = 0x1e000, scoped, tag = 'input window, operand 0, single buffered']
    #allocation3 [shape = 's32[1]{0}', space=sflag, size = 0x4, scoped, tag = 'scoped memory for tpu_custom_call.1']
    #allocation4 [shape = 's32[1]{0}', space=sflag, size = 0x4, scoped, tag = 'scoped memory for tpu_custom_call.1']
    #allocation5 [shape = 'u8[24576]{0}', space=vmem, size = 0x6000, scoped, tag = 'output window, operand 0, single buffered']
    %6 = vsyncpa [#allocation3], 0
    %7 = vsyncpa [#allocation4], 0
    // Predicated region
    $region2: #{tpu_custom_call.1} parent=1 // pred_check
      _
    $region3: #{tpu_custom_call.1} parent=1 // pred_check_branch
      %9 = sbr.rel (0) target = $region5
    $region4: #{tpu_custom_call.1} parent=1 // pred_region
      %s11 = ssub.s32 3840, 3840
      %12 = vsyncadd [#allocation3], %s11
      %s13 = sshll.u32 [#allocation2], 4
      %s14 = int_to_ptr.vmem [resolvable:$true] %s13
      %19 = dma.hbm_to_vmem [thread:$0]  %s0, 3840, %s14, [#allocation3], 768, 768, 48
    $region5: #{tpu_custom_call.1} parent=1 // pred_fallthru
      _
    // Predicated region
    $region6: #{tpu_custom_call.1} parent=1 // pred_check
      _
    $region7: #{tpu_custom_call.1} parent=1 // pred_check_branch
      %21 = sbr.rel (0) target = $region9
    $region8: #{tpu_custom_call.1} parent=1 // pred_region
      %22 = dma.done [#allocation3], 3840
    $region9: #{tpu_custom_call.1} parent=1 // pred_fallthru
      _
    %v23 = vld [vmem:[#allocation2] sm:$0xff]
    %v24 = vld [vmem:[#allocation2 + $0x8] sm:$0xff]
    %v25 = vld [vmem:[#allocation2 + $0x10] sm:$0xff]
    %v26 = vld [vmem:[#allocation2 + $0x18] sm:$0xff]
    %v27 = vld [vmem:[#allocation2 + $0x20] sm:$0xff]
    %v28 = vld [vmem:[#allocation2 + $0x28] sm:$0xff]
    %v29 = vld [vmem:[#allocation2 + $0x30] sm:$0xff]
    %v30 = vld [vmem:[#allocation2 + $0x38] sm:$0xff]
    %v31 = vld [vmem:[#allocation2 + $0x40] sm:$0xff]
    %v32 = vld [vmem:[#allocation2 + $0x48] sm:$0xff]
    %v33 = vld [vmem:[#allocation2 + $0x50] sm:$0xff]
    %v34 = vld [vmem:[#allocation2 + $0x58] sm:$0xff]
    %v35 = vld [vmem:[#allocation2 + $0x60] sm:$0xff]
    %v36 = vld [vmem:[#allocation2 + $0x68] sm:$0xff]
    %v37 = vld [vmem:[#allocation2 + $0x70] sm:$0xff]
    %v38 = vld [vmem:[#allocation2 + $0x78] sm:$0xff]
    %v39 = vld [vmem:[#allocation2 + $0x80] sm:$0xff]
    %v40 = vld [vmem:[#allocation2 + $0x88] sm:$0xff]
    %v41 = vld [vmem:[#allocation2 + $0x90] sm:$0xff]
    %v42 = vld [vmem:[#allocation2 + $0x98] sm:$0xff]
    %v43 = vld [vmem:[#allocation2 + $0xa0] sm:$0xff]
    %v44 = vld [vmem:[#allocation2 + $0xa8] sm:$0xff]
    %v45 = vld [vmem:[#allocation2 + $0xb0] sm:$0xff]
    %v46 = vld [vmem:[#allocation2 + $0xb8] sm:$0xff]
    %v47 = vld [vmem:[#allocation2 + $0xc0] sm:$0xff]
    %v48 = vld [vmem:[#allocation2 + $0xc8] sm:$0xff]
    %v49 = vld [vmem:[#allocation2 + $0xd0] sm:$0xff]
    %v50 = vld [vmem:[#allocation2 + $0xd8] sm:$0xff]
    %v51 = vld [vmem:[#allocation2 + $0xe0] sm:$0xff]
    %v52 = vld [vmem:[#allocation2 + $0xe8] sm:$0xff]
    %v53 = vrot.slane %v23, 4
    %v54 = vadd.f32 %v23, %v53
    %v55 = vrot.slane %v54, 2
    %v56 = vadd.f32 %v54, %v55
    %v57 = vrot.slane %v56, 1
    %v58 = vadd.f32 %v56, %v57
    %v59 = vrot.slane %v24, 4
    %v60 = vadd.f32 %v24, %v59
    %v61 = vrot.slane %v60, 2
    %v62 = vadd.f32 %v60, %v61
    %v63 = vrot.slane %v62, 1
    %v64 = vadd.f32 %v62, %v63
    %v65 = vrot.slane %v25, 4
    %v66 = vadd.f32 %v25, %v65
    %v67 = vrot.slane %v66, 2
    %v68 = vadd.f32 %v66, %v67
    %v69 = vrot.slane %v68, 1
    %v70 = vadd.f32 %v68, %v69
    %v71 = vrot.slane %v26, 4
    %v72 = vadd.f32 %v26, %v71
    %v73 = vrot.slane %v72, 2
    %v74 = vadd.f32 %v72, %v73
    %v75 = vrot.slane %v74, 1
    %v76 = vadd.f32 %v74, %v75
    %v77 = vrot.slane %v27, 4
    %v78 = vadd.f32 %v27, %v77
    %v79 = vrot.slane %v78, 2
    %v80 = vadd.f32 %v78, %v79
    %v81 = vrot.slane %v80, 1
    %v82 = vadd.f32 %v80, %v81
    %v83 = vrot.slane %v28, 4
    %v84 = vadd.f32 %v28, %v83
    %v85 = vrot.slane %v84, 2
    %v86 = vadd.f32 %v84, %v85
    %v87 = vrot.slane %v86, 1
    %v88 = vadd.f32 %v86, %v87
    %v89 = vrot.slane %v29, 4
    %v90 = vadd.f32 %v29, %v89
    %v91 = vrot.slane %v90, 2
    %v92 = vadd.f32 %v90, %v91
    %v93 = vrot.slane %v92, 1
    %v94 = vadd.f32 %v92, %v93
    %v95 = vrot.slane %v30, 4
    %v96 = vadd.f32 %v30, %v95
    %v97 = vrot.slane %v96, 2
    %v98 = vadd.f32 %v96, %v97
    %v99 = vrot.slane %v98, 1
    %v100 = vadd.f32 %v98, %v99
    %v101 = vrot.slane %v31, 4
    %v102 = vadd.f32 %v31, %v101
    %v103 = vrot.slane %v102, 2
    %v104 = vadd.f32 %v102, %v103
    %v105 = vrot.slane %v104, 1
    %v106 = vadd.f32 %v104, %v105
    %v107 = vrot.slane %v32, 4
    %v108 = vadd.f32 %v32, %v107
    %v109 = vrot.slane %v108, 2
    %v110 = vadd.f32 %v108, %v109
    %v111 = vrot.slane %v110, 1
    %v112 = vadd.f32 %v110, %v111
    %v113 = vrot.slane %v33, 4
    %v114 = vadd.f32 %v33, %v113
    %v115 = vrot.slane %v114, 2
    %v116 = vadd.f32 %v114, %v115
    %v117 = vrot.slane %v116, 1
    %v118 = vadd.f32 %v116, %v117
    %v119 = vrot.slane %v34, 4
    %v120 = vadd.f32 %v34, %v119
    %v121 = vrot.slane %v120, 2
    %v122 = vadd.f32 %v120, %v121
    %v123 = vrot.slane %v122, 1
    %v124 = vadd.f32 %v122, %v123
    %v125 = vrot.slane %v35, 4
    %v126 = vadd.f32 %v35, %v125
    %v127 = vrot.slane %v126, 2
    %v128 = vadd.f32 %v126, %v127
    %v129 = vrot.slane %v128, 1
    %v130 = vadd.f32 %v128, %v129
    %v131 = vrot.slane %v36, 4
    %v132 = vadd.f32 %v36, %v131
    %v133 = vrot.slane %v132, 2
    %v134 = vadd.f32 %v132, %v133
    %v135 = vrot.slane %v134, 1
    %v136 = vadd.f32 %v134, %v135
    %v137 = vrot.slane %v37, 4
    %v138 = vadd.f32 %v37, %v137
    %v139 = vrot.slane %v138, 2
    %v140 = vadd.f32 %v138, %v139
    %v141 = vrot.slane %v140, 1
    %v142 = vadd.f32 %v140, %v141
    %v143 = vrot.slane %v38, 4
    %v144 = vadd.f32 %v38, %v143
    %v145 = vrot.slane %v144, 2
    %v146 = vadd.f32 %v144, %v145
    %v147 = vrot.slane %v146, 1
    %v148 = vadd.f32 %v146, %v147
    %v149 = vrot.slane %v39, 4
    %v150 = vadd.f32 %v39, %v149
    %v151 = vrot.slane %v150, 2
    %v152 = vadd.f32 %v150, %v151
    %v153 = vrot.slane %v152, 1
    %v154 = vadd.f32 %v152, %v153
    %v155 = vrot.slane %v40, 4
    %v156 = vadd.f32 %v40, %v155
    %v157 = vrot.slane %v156, 2
    %v158 = vadd.f32 %v156, %v157
    %v159 = vrot.slane %v158, 1
    %v160 = vadd.f32 %v158, %v159
    %v161 = vrot.slane %v41, 4
    %v162 = vadd.f32 %v41, %v161
    %v163 = vrot.slane %v162, 2
    %v164 = vadd.f32 %v162, %v163
    %v165 = vrot.slane %v164, 1
    %v166 = vadd.f32 %v164, %v165
    %v167 = vrot.slane %v42, 4
    %v168 = vadd.f32 %v42, %v167
    %v169 = vrot.slane %v168, 2
    %v170 = vadd.f32 %v168, %v169
    %v171 = vrot.slane %v170, 1
    %v172 = vadd.f32 %v170, %v171
    %v173 = vrot.slane %v43, 4
    %v174 = vadd.f32 %v43, %v173
    %v175 = vrot.slane %v174, 2
    %v176 = vadd.f32 %v174, %v175
    %v177 = vrot.slane %v176, 1
    %v178 = vadd.f32 %v176, %v177
    %v179 = vrot.slane %v44, 4
    %v180 = vadd.f32 %v44, %v179
    %v181 = vrot.slane %v180, 2
    %v182 = vadd.f32 %v180, %v181
    %v183 = vrot.slane %v182, 1
    %v184 = vadd.f32 %v182, %v183
    %v185 = vrot.slane %v45, 4
    %v186 = vadd.f32 %v45, %v185
    %v187 = vrot.slane %v186, 2
    %v188 = vadd.f32 %v186, %v187
    %v189 = vrot.slane %v188, 1
    %v190 = vadd.f32 %v188, %v189
    %v191 = vrot.slane %v46, 4
    %v192 = vadd.f32 %v46, %v191
    %v193 = vrot.slane %v192, 2
    %v194 = vadd.f32 %v192, %v193
    %v195 = vrot.slane %v194, 1
    %v196 = vadd.f32 %v194, %v195
    %v197 = vrot.slane %v47, 4
    %v198 = vadd.f32 %v47, %v197
    %v199 = vrot.slane %v198, 2
    %v200 = vadd.f32 %v198, %v199
    %v201 = vrot.slane %v200, 1
    %v202 = vadd.f32 %v200, %v201
    %v203 = vrot.slane %v48, 4
    %v204 = vadd.f32 %v48, %v203
    %v205 = vrot.slane %v204, 2
    %v206 = vadd.f32 %v204, %v205
    %v207 = vrot.slane %v206, 1
    %v208 = vadd.f32 %v206, %v207
    %v209 = vrot.slane %v49, 4
    %v210 = vadd.f32 %v49, %v209
    %v211 = vrot.slane %v210, 2
    %v212 = vadd.f32 %v210, %v211
    %v213 = vrot.slane %v212, 1
    %v214 = vadd.f32 %v212, %v213
    %v215 = vrot.slane %v50, 4
    %v216 = vadd.f32 %v50, %v215
    %v217 = vrot.slane %v216, 2
    %v218 = vadd.f32 %v216, %v217
    %v219 = vrot.slane %v218, 1
    %v220 = vadd.f32 %v218, %v219
    %v221 = vrot.slane %v51, 4
    %v222 = vadd.f32 %v51, %v221
    %v223 = vrot.slane %v222, 2
    %v224 = vadd.f32 %v222, %v223
    %v225 = vrot.slane %v224, 1
    %v226 = vadd.f32 %v224, %v225
    %v227 = vrot.slane %v52, 4
    %v228 = vadd.f32 %v52, %v227
    %v229 = vrot.slane %v228, 2
    %v230 = vadd.f32 %v228, %v229
    %v231 = vrot.slane %v230, 1
    %v232 = vadd.f32 %v230, %v231
    %v233 = vmul.f32 %v58, %v58
    %v234 = vmul.f32 %v64, %v64
    %v235 = vmul.f32 %v70, %v70
    %v236 = vmul.f32 %v76, %v76
    %v237 = vmul.f32 %v82, %v82
    %v238 = vmul.f32 %v88, %v88
    %v239 = vmul.f32 %v94, %v94
    %v240 = vmul.f32 %v100, %v100
    %v241 = vmul.f32 %v106, %v106
    %v242 = vmul.f32 %v112, %v112
    %v243 = vmul.f32 %v118, %v118
    %v244 = vmul.f32 %v124, %v124
    %v245 = vmul.f32 %v130, %v130
    %v246 = vmul.f32 %v136, %v136
    %v247 = vmul.f32 %v142, %v142
    %v248 = vmul.f32 %v148, %v148
    %v249 = vmul.f32 %v154, %v154
    %v250 = vmul.f32 %v160, %v160
    %v251 = vmul.f32 %v166, %v166
    %v252 = vmul.f32 %v172, %v172
    %v253 = vmul.f32 %v178, %v178
    %v254 = vmul.f32 %v184, %v184
    %v255 = vmul.f32 %v190, %v190
    %v256 = vmul.f32 %v196, %v196
    %v257 = vmul.f32 %v202, %v202
    %v258 = vmul.f32 %v208, %v208
    %v259 = vmul.f32 %v214, %v214
    %v260 = vmul.f32 %v220, %v220
    %v261 = vmul.f32 %v226, %v226
    %v262 = vmul.f32 %v232, %v232
    %vm293 = vcmask 1041409
    %v294 = vsel %vm293, %v239, %v233
    %vm295 = vcmask 1042434
    %v296 = vsel %vm295, %v245, %v294
    %vm297 = vcmask 1043459
    %v298 = vsel %vm297, %v251, %v296
    %vm299 = vcmask 1044484
    %v300 = vsel %vm299, %v257, %v298
    %v301 = vsel %vm293, %v240, %v234
    %v302 = vsel %vm295, %v246, %v301
    %v303 = vsel %vm297, %v252, %v302
    %v304 = vsel %vm299, %v258, %v303
    %v305 = vsel %vm293, %v241, %v235
    %v306 = vsel %vm295, %v247, %v305
    %v307 = vsel %vm297, %v253, %v306
    %v308 = vsel %vm299, %v259, %v307
    %v309 = vsel %vm293, %v242, %v236
    %v310 = vsel %vm295, %v248, %v309
    %v311 = vsel %vm297, %v254, %v310
    %v312 = vsel %vm299, %v260, %v311
    %v313 = vsel %vm293, %v243, %v237
    %v314 = vsel %vm295, %v249, %v313
    %v315 = vsel %vm297, %v255, %v314
    %v316 = vsel %vm299, %v261, %v315
    %v317 = vsel %vm293, %v244, %v238
    %v318 = vsel %vm295, %v250, %v317
    %v319 = vsel %vm297, %v256, %v318
    %v320 = vsel %vm299, %v262, %v319
    %vm327 = vcmask 1044480
    %v328 = vsel %vm327, %v300, 0.0
    %v329 = vsel %vm327, %v304, 0.0
    %v330 = vadd.f32 %v328, %v329
    %v331 = vsel %vm327, %v308, 0.0
    %v332 = vadd.f32 %v330, %v331
    %v333 = vsel %vm327, %v312, 0.0
    %v334 = vadd.f32 %v332, %v333
    %v335 = vsel %vm327, %v316, 0.0
    %v336 = vadd.f32 %v334, %v335
    %v337 = vsel %vm327, %v320, 0.0
    %v338 = vadd.f32 %v336, %v337
    %339 = vadd.xlane.f32.xlu0 %v338
    %v340 = vpop.xlane.xlu0 %339
    %v341 = vmax.f32 %v340, 6.4e-23
    %v342 = vrsqrt.pop %v341
    %v344 = vrot.slane %v342, 1
    %v345 = vrot.slane %v342, 2
    %v346 = vrot.slane %v342, 3
    %v347 = vrot.slane %v342, 4
    %v353 = vmul.f32 %v58, %v342
    %v354 = vmul.f32 %v64, %v342
    %v355 = vmul.f32 %v70, %v342
    %v356 = vmul.f32 %v76, %v342
    %v357 = vmul.f32 %v82, %v342
    %v358 = vmul.f32 %v88, %v342
    %v359 = vmul.f32 %v94, %v344
    %v360 = vmul.f32 %v100, %v344
    %v361 = vmul.f32 %v106, %v344
    %v362 = vmul.f32 %v112, %v344
    %v363 = vmul.f32 %v118, %v344
    %v364 = vmul.f32 %v124, %v344
    %v365 = vmul.f32 %v130, %v345
    %v366 = vmul.f32 %v136, %v345
    %v367 = vmul.f32 %v142, %v345
    %v368 = vmul.f32 %v148, %v345
    %v369 = vmul.f32 %v154, %v345
    %v370 = vmul.f32 %v160, %v345
    %v371 = vmul.f32 %v166, %v346
    %v372 = vmul.f32 %v172, %v346
    %v373 = vmul.f32 %v178, %v346
    %v374 = vmul.f32 %v184, %v346
    %v375 = vmul.f32 %v190, %v346
    %v376 = vmul.f32 %v196, %v346
    %v377 = vmul.f32 %v202, %v347
    %v378 = vmul.f32 %v208, %v347
    %v379 = vmul.f32 %v214, %v347
    %v380 = vmul.f32 %v220, %v347
    %v381 = vmul.f32 %v226, %v347
    %v382 = vmul.f32 %v232, %v347
    %v413 = vrot.slane %v359, 7
    %v414 = vsel %vm293, %v413, %v353
    %v415 = vrot.slane %v365, 6
    %v416 = vsel %vm295, %v415, %v414
    %v417 = vrot.slane %v371, 5
    %v418 = vsel %vm297, %v417, %v416
    %v419 = vrot.slane %v377, 4
    %v420 = vsel %vm299, %v419, %v418
    %v421 = vrot.slane %v360, 7
    %v422 = vsel %vm293, %v421, %v354
    %v423 = vrot.slane %v366, 6
    %v424 = vsel %vm295, %v423, %v422
    %v425 = vrot.slane %v372, 5
    %v426 = vsel %vm297, %v425, %v424
    %v427 = vrot.slane %v378, 4
    %v428 = vsel %vm299, %v427, %v426
    %v429 = vrot.slane %v361, 7
    %v430 = vsel %vm293, %v429, %v355
    %v431 = vrot.slane %v367, 6
    %v432 = vsel %vm295, %v431, %v430
    %v433 = vrot.slane %v373, 5
    %v434 = vsel %vm297, %v433, %v432
    %v435 = vrot.slane %v379, 4
    %v436 = vsel %vm299, %v435, %v434
    %v437 = vrot.slane %v362, 7
    %v438 = vsel %vm293, %v437, %v356
    %v439 = vrot.slane %v368, 6
    %v440 = vsel %vm295, %v439, %v438
    %v441 = vrot.slane %v374, 5
    %v442 = vsel %vm297, %v441, %v440
    %v443 = vrot.slane %v380, 4
    %v444 = vsel %vm299, %v443, %v442
    %v445 = vrot.slane %v363, 7
    %v446 = vsel %vm293, %v445, %v357
    %v447 = vrot.slane %v369, 6
    %v448 = vsel %vm295, %v447, %v446
    %v449 = vrot.slane %v375, 5
    %v450 = vsel %vm297, %v449, %v448
    %v451 = vrot.slane %v381, 4
    %v452 = vsel %vm299, %v451, %v450
    %v453 = vrot.slane %v364, 7
    %v454 = vsel %vm293, %v453, %v358
    %v455 = vrot.slane %v370, 6
    %v456 = vsel %vm295, %v455, %v454
    %v457 = vrot.slane %v376, 5
    %v458 = vsel %vm297, %v457, %v456
    %v459 = vrot.slane %v382, 4
    %v460 = vsel %vm299, %v459, %v458
    %467 = vst [vmem:[#allocation5] sm:$0x1f] %v420
    %468 = vst [vmem:[#allocation5 + $0x8] sm:$0x1f] %v428
    %469 = vst [vmem:[#allocation5 + $0x10] sm:$0x1f] %v436
    %470 = vst [vmem:[#allocation5 + $0x18] sm:$0x1f] %v444
    %471 = vst [vmem:[#allocation5 + $0x20] sm:$0x1f] %v452
    %472 = vst [vmem:[#allocation5 + $0x28] sm:$0x1f] %v460
    // Predicated region
    $region10: #{tpu_custom_call.1} parent=1 // pred_check
      _
    $region11: #{tpu_custom_call.1} parent=1 // pred_check_branch
      %474 = sbr.rel (0) target = $region13
    $region12: #{tpu_custom_call.1} parent=1 // pred_region
      %s476 = ssub.s32 768, 768
      %477 = vsyncadd [#allocation4], %s476
      %s479 = sshll.u32 [#allocation5], 4
      %s480 = int_to_ptr.vmem [resolvable:$true] %s479
      %482 = dma.vmem_to_hbm [thread:$0]  %s480, 768, %s1, [#allocation4]
    $region13: #{tpu_custom_call.1} parent=1 // pred_fallthru
      _
    // Predicated region
    $region14: #{tpu_custom_call.1} parent=1 // pred_check
      _
    $region15: #{tpu_custom_call.1} parent=1 // pred_check_branch
      %484 = sbr.rel (0) target = $region17
    $region16: #{tpu_custom_call.1} parent=1 // pred_region
      %485 = dma.done [#allocation4], 768
    $region17: #{tpu_custom_call.1} parent=1 // pred_fallthru
      _
    %486 = vsyncpa [#allocation3], 1
    %487 = vsyncpa [#allocation4], 1

</llo_original>
